<compile_context>
chip_gen: v5e
topology: v5e:2x2
jax: 0.10.0
libtpu: 0.0.40
codegen_flags: <defaults>
</compile_context>

<pallas_src>
import functools
import math

import jax
import jax.numpy as jnp
from jax.experimental import pallas as pl
from jax.experimental.pallas import tpu as pltpu


# ---------------------------------------------------------------------------
# LayerNormalization kernel (Decoder.norm)
# ---------------------------------------------------------------------------
def _layer_norm_kernel(x_ref, alpha_ref, bias_ref, o_ref, *, eps):
    # x_ref: (TM, D)   alpha_ref/bias_ref: (1, 1)   o_ref: (TM, D)
    x = x_ref[...].astype(jnp.float32)
    d = x.shape[-1]
    mean = jnp.mean(x, axis=-1, keepdims=True)
    centered = x - mean
    # torch.Tensor.std defaults to the unbiased estimator (divide by N-1).
    var = jnp.sum(centered * centered, axis=-1, keepdims=True) / (d - 1)
    std = jnp.sqrt(var)
    y = alpha_ref[...] * centered / (std + eps) + bias_ref[...]
    o_ref[...] = y.astype(o_ref.dtype)


@functools.partial(jax.jit, static_argnames=("eps", "tile_m"))
def layer_normalization(x, alpha, bias, *, eps=1e-6, tile_m=256):
    """x: (..., d_model); alpha, bias: scalar parameters (shape (1,))."""
    orig_shape = x.shape
    d = x.shape[-1]
    x2 = x.reshape(-1, d)
    m = x2.shape[0]
    mp = ((m + tile_m - 1) // tile_m) * tile_m  # pad rows to a full tile
    if mp != m:
        x2 = jnp.pad(x2, ((0, mp - m), (0, 0)))

    alpha2 = jnp.asarray(alpha, jnp.float32).reshape(1, 1)
    bias2 = jnp.asarray(bias, jnp.float32).reshape(1, 1)

    itemsize = x2.dtype.itemsize
    cost = pl.CostEstimate(
        flops=int(8 * mp * d),
        transcendentals=int(mp),
        bytes_accessed=int(2 * mp * d * itemsize + 8),
    )

    out = pl.pallas_call(
        functools.partial(_layer_norm_kernel, eps=eps),
        out_shape=jax.ShapeDtypeStruct((mp, d), x.dtype),
        grid_spec=pltpu.PrefetchScalarGridSpec(
            num_scalar_prefetch=0,
            grid=(mp // tile_m,),
            in_specs=[
                pl.BlockSpec((tile_m, d), lambda i: (i, 0)),
                pl.BlockSpec((1, 1), lambda i: (0, 0)),
                pl.BlockSpec((1, 1), lambda i: (0, 0)),
            ],
            out_specs=pl.BlockSpec((tile_m, d), lambda i: (i, 0)),
        ),
        compiler_params=pltpu.CompilerParams(
            dimension_semantics=("parallel",),
            vmem_limit_bytes=64 * 1024 * 1024,
        ),
        cost_estimate=cost,
    )(x2, alpha2, bias2)

    if mp != m:
        out = out[:m]
    return out.reshape(orig_shape)


# ---------------------------------------------------------------------------
# FeedForward kernel (improved per performance review); used as a demo layer.
# ---------------------------------------------------------------------------
def _ffn_kernel(x_ref, w1_ref, b1_ref, w2_ref, b2_ref, o_ref, acc_ref):
    # grid = (M // TM, d_ff // TF); axis 1 is the d_ff reduction ("arbitrary").
    # x_ref:(TM,d_model) w1_ref:(d_model,TF) b1_ref:(1,TF)
    # w2_ref:(TF,d_model) b2_ref:(1,d_model) o_ref:(TM,d_model) acc:(TM,d_model) f32
    f = pl.program_id(1)

    @pl.when(f == 0)
    def _():
        acc_ref[...] = jnp.zeros_like(acc_ref)

    # linear_1 chunk + ReLU: native-dtype operands straight into the MXU,
    # f32 accumulation (no whole-tile weight casts).
    h = jnp.dot(x_ref[...], w1_ref[...], preferred_element_type=jnp.float32)
    h = jnp.maximum(h + b1_ref[...], 0.0)

    # dropout (eval mode) == identity
    # TODO(synk): training-mode dropout (prng_random_bits mask + 1/(1-p)) not emitted.

    # partial linear_2 over this d_ff chunk, accumulated in f32 VMEM scratch.
    acc_ref[...] += jnp.dot(h.astype(w2_ref.dtype), w2_ref[...],
                            preferred_element_type=jnp.float32)

    @pl.when(f == pl.num_programs(1) - 1)
    def _():
        o_ref[...] = (acc_ref[...] + b2_ref[...].astype(jnp.float32)
                      ).astype(o_ref.dtype)


@functools.partial(jax.jit, static_argnames=("tile_m", "tile_f"))
def feed_forward_block(x, w1, b1, w2, b2, *, tile_m=256, tile_f=256):
    """x: (..., d_model). w1:(d_model,d_ff) b1:(d_ff,) w2:(d_ff,d_model) b2:(d_model,)."""
    orig_shape = x.shape
    d_model = x.shape[-1]
    d_ff = w1.shape[1]
    x2 = x.reshape(-1, d_model)
    m = x2.shape[0]
    mp = ((m + tile_m - 1) // tile_m) * tile_m
    if mp != m:
        x2 = jnp.pad(x2, ((0, mp - m), (0, 0)))

    tf = tile_f if (d_ff % tile_f == 0) else d_ff  # chunk of the hidden dim
    b1_2 = b1.reshape(1, d_ff)
    b2_2 = b2.reshape(1, d_model)

    itemsize = x2.dtype.itemsize
    cost = pl.CostEstimate(
        flops=int(4 * mp * d_model * d_ff),
        transcendentals=0,
        bytes_accessed=int((x2.size + w1.size + w2.size + b1.size + b2.size
                            + mp * d_model) * itemsize),
    )

    out = pl.pallas_call(
        _ffn_kernel,
        out_shape=jax.ShapeDtypeStruct((mp, d_model), x.dtype),
        grid_spec=pltpu.PrefetchScalarGridSpec(
            num_scalar_prefetch=0,
            grid=(mp // tile_m, d_ff // tf),
            in_specs=[
                pl.BlockSpec((tile_m, d_model), lambda i, f: (i, 0)),
                pl.BlockSpec((d_model, tf), lambda i, f: (0, f)),
                pl.BlockSpec((1, tf), lambda i, f: (0, f)),
                pl.BlockSpec((tf, d_model), lambda i, f: (f, 0)),
                pl.BlockSpec((1, d_model), lambda i, f: (0, 0)),
            ],
            out_specs=pl.BlockSpec((tile_m, d_model), lambda i, f: (i, 0)),
            scratch_shapes=[pltpu.VMEM((tile_m, d_model), jnp.float32)],
        ),
        compiler_params=pltpu.CompilerParams(
            dimension_semantics=("parallel", "arbitrary"),
            vmem_limit_bytes=64 * 1024 * 1024,
        ),
        cost_estimate=cost,
    )(x2, w1, b1_2, w2, b2_2)

    if mp != m:
        out = out[:m]
    return out.reshape(orig_shape)


# ---------------------------------------------------------------------------
# Decoder.forward
# ---------------------------------------------------------------------------
def decoder_forward(x, encoder_output, src_mask, tgt_mask, layers, alpha, bias,
                    *, eps=1e-6, tile_m=256):
    """Port of Decoder.forward: apply each supplied layer, then LayerNormalization."""
    # TODO(synk): DecoderBlock internals are not part of the provided spec;
    # `layers` is the externally supplied stack, exactly as in the PyTorch module.
    for layer in layers:
        x = layer(x, encoder_output, src_mask, tgt_mask)
    return layer_normalization(x, alpha, bias, eps=eps, tile_m=tile_m)


def make_demo_ffn_layer(w1, b1, w2, b2):
    """Demo stand-in decoder layer (the real DecoderBlock is not in the spec)."""
    def layer(x, encoder_output, src_mask, tgt_mask):
        del encoder_output, src_mask, tgt_mask
        return feed_forward_block(x, w1, b1, w2, b2)
    return layer


def init_ffn_params(key, d_model, d_ff, dtype=jnp.float32):
    """nn.Linear-style init; weights stored (in, out) == PyTorch weight.T."""
    k1, k2, k3, k4 = jax.random.split(key, 4)
    bound1 = 1.0 / math.sqrt(d_model)
    bound2 = 1.0 / math.sqrt(d_ff)
    w1 = jax.random.uniform(k1, (d_model, d_ff), dtype, -bound1, bound1)
    b1 = jax.random.uniform(k2, (d_ff,), dtype, -bound1, bound1)
    w2 = jax.random.uniform(k3, (d_ff, d_model), dtype, -bound2, bound2)
    b2 = jax.random.uniform(k4, (d_model,), dtype, -bound2, bound2)
    return w1, b1, w2, b2


if __name__ == "__main__":
    key = jax.random.PRNGKey(0)
    kx, ke, kp = jax.random.split(key, 3)

    # Small but 128-aligned shapes (lane-dense last dim per the perf review).
    batch, seq, d_model, d_ff = 2, 128, 128, 512
    eps = 1e-6

    x = jax.random.normal(kx, (batch, seq, d_model), dtype=jnp.float32)
    encoder_output = jax.random.normal(ke, (batch, seq, d_model), dtype=jnp.float32)
    src_mask = jnp.ones((batch, 1, 1, seq), dtype=jnp.float32)
    tgt_mask = jnp.ones((batch, 1, seq, seq), dtype=jnp.float32)

    w1, b1, w2, b2 = init_ffn_params(kp, d_model, d_ff)
    # Module init is alpha=1, bias=0; use non-trivial values for a stronger check.
    alpha = jnp.full((1,), 1.5, dtype=jnp.float32)
    bias = jnp.full((1,), -0.25, dtype=jnp.float32)

    layers = (make_demo_ffn_layer(w1, b1, w2, b2),)

    y = decoder_forward(x, encoder_output, src_mask, tgt_mask, layers, alpha, bias,
                        eps=eps)
    y = jax.block_until_ready(y)

    # Pure-JAX reference of the same Decoder forward.
    h = jnp.maximum(x @ w1 + b1, 0.0) @ w2 + b2
    mean = h.mean(axis=-1, keepdims=True)
    std = jnp.std(h, axis=-1, keepdims=True, ddof=1)   # unbiased, like torch.std
    ref = alpha * (h - mean) / (std + eps) + bias

    assert y.shape == (batch, seq, d_model)
    assert jnp.allclose(y, ref, atol=1e-4, rtol=1e-4), "mismatch vs reference"

    print("KERNEL_OK")
</pallas_src>

<mosaic_0001>
module attributes {stable_mosaic.version = 11 : i64} {
  func.func @_ffn_kernel(%arg0: i32, %arg1: i32, %arg2: memref<256x128xf32, #tpu.memory_space<vmem>>, %arg3: memref<128x256xf32, #tpu.memory_space<vmem>>, %arg4: memref<1x256xf32, #tpu.memory_space<vmem>>, %arg5: memref<256x128xf32, #tpu.memory_space<vmem>>, %arg6: memref<1x128xf32, #tpu.memory_space<vmem>>, %arg7: memref<256x128xf32, #tpu.memory_space<vmem>>, %arg8: memref<256x128xf32, #tpu.memory_space<vmem>>) attributes {dimension_semantics = [#tpu.dimension_semantics<parallel>, #tpu.dimension_semantics<arbitrary>], iteration_bounds = array<i64: 1, 2>, scalar_prefetch = 0 : i64, scratch_operands = 1 : i64, tpu.core_type = #tpu.core_type<tc>, window_params = [{transform_indices = @transform_0, window_bounds = array<i64: 256, 128>}, {transform_indices = @transform_1, window_bounds = array<i64: 128, 256>}, {transform_indices = @transform_2, window_bounds = array<i64: 1, 256>}, {transform_indices = @transform_3, window_bounds = array<i64: 256, 128>}, {pipeline_mode = #tpu.pipeline_mode<synchronous>, transform_indices = @transform_4, window_bounds = array<i64: 1, 128>}, {transform_indices = @transform_5, window_bounds = array<i64: 256, 128>}]} {
    %c0_i32 = arith.constant 0 : i32
    %0 = arith.cmpi eq, %arg1, %c0_i32 : i32
    %1 = arith.extui %0 : i1 to i32
    %c0_i32_0 = arith.constant 0 : i32
    %2 = arith.cmpi ne, %1, %c0_i32_0 : i32
    scf.if %2 {
      %cst_15 = arith.constant 0.000000e+00 : f32
      %19 = vector.broadcast %cst_15 : f32 to vector<256x128xf32>
      %c0_16 = arith.constant 0 : index
      %c0_17 = arith.constant 0 : index
      %20 = vector.load %arg8[%c0_16, %c0_17] : memref<256x128xf32, #tpu.memory_space<vmem>>, vector<256x128xf32>
      tpu.vector_store %arg8[%c0_16, %c0_17], %19 {strides = array<i32>} : memref<256x128xf32, #tpu.memory_space<vmem>>, vector<256x128xf32>,
    } else {
    }
    %c0 = arith.constant 0 : index
    %c0_1 = arith.constant 0 : index
    %3 = vector.load %arg2[%c0, %c0_1] : memref<256x128xf32, #tpu.memory_space<vmem>>, vector<256x128xf32>
    %c0_2 = arith.constant 0 : index
    %c0_3 = arith.constant 0 : index
    %4 = vector.load %arg3[%c0_2, %c0_3] : memref<128x256xf32, #tpu.memory_space<vmem>>, vector<128x256xf32>
    %cst = arith.constant dense<0.000000e+00> : vector<256x256xf32>
    %5 = tpu.matmul %3, %4, %cst {dimension_numbers = #tpu.dot_dimension_numbers<[1], [0], [0], [1], [0, 0, 1, 1], [], []>} : vector<256x128xf32>, vector<128x256xf32>, vector<256x256xf32> -> vector<256x256xf32>
    %c0_4 = arith.constant 0 : index
    %c0_5 = arith.constant 0 : index
    %6 = vector.load %arg4[%c0_4, %c0_5] : memref<1x256xf32, #tpu.memory_space<vmem>>, vector<1x256xf32>
    %7 = vector.broadcast %6 : vector<1x256xf32> to vector<256x256xf32>
    %8 = arith.addf %5, %7 : vector<256x256xf32>
    %cst_6 = arith.constant 0.000000e+00 : f32
    %9 = vector.broadcast %cst_6 : f32 to vector<256x256xf32>
    %10 = arith.maximumf %8, %9 : vector<256x256xf32>
    %c0_7 = arith.constant 0 : index
    %c0_8 = arith.constant 0 : index
    %11 = vector.load %arg8[%c0_7, %c0_8] : memref<256x128xf32, #tpu.memory_space<vmem>>, vector<256x128xf32>
    %c0_9 = arith.constant 0 : index
    %c0_10 = arith.constant 0 : index
    %12 = vector.load %arg5[%c0_9, %c0_10] : memref<256x128xf32, #tpu.memory_space<vmem>>, vector<256x128xf32>
    %cst_11 = arith.constant dense<0.000000e+00> : vector<256x128xf32>
    %13 = tpu.matmul %10, %12, %cst_11 {dimension_numbers = #tpu.dot_dimension_numbers<[1], [0], [0], [1], [0, 0, 1, 1], [], []>} : vector<256x256xf32>, vector<256x128xf32>, vector<256x128xf32> -> vector<256x128xf32>
    %14 = arith.addf %11, %13 : vector<256x128xf32>
    %c0_12 = arith.constant 0 : index
    %c0_13 = arith.constant 0 : index
    %15 = vector.load %arg8[%c0_12, %c0_13] : memref<256x128xf32, #tpu.memory_space<vmem>>, vector<256x128xf32>
    tpu.vector_store %arg8[%c0_12, %c0_13], %14 {strides = array<i32>} : memref<256x128xf32, #tpu.memory_space<vmem>>, vector<256x128xf32>,
    %c1_i32 = arith.constant 1 : i32
    %16 = arith.cmpi eq, %arg1, %c1_i32 : i32
    %17 = arith.extui %16 : i1 to i32
    %c0_i32_14 = arith.constant 0 : i32
    %18 = arith.cmpi ne, %17, %c0_i32_14 : i32
    scf.if %18 {
      %c0_15 = arith.constant 0 : index
      %c0_16 = arith.constant 0 : index
      %19 = vector.load %arg8[%c0_15, %c0_16] : memref<256x128xf32, #tpu.memory_space<vmem>>, vector<256x128xf32>
      %c0_17 = arith.constant 0 : index
      %c0_18 = arith.constant 0 : index
      %20 = vector.load %arg6[%c0_17, %c0_18] : memref<1x128xf32, #tpu.memory_space<vmem>>, vector<1x128xf32>
      %21 = vector.broadcast %20 : vector<1x128xf32> to vector<256x128xf32>
      %22 = arith.addf %19, %21 : vector<256x128xf32>
      %c0_19 = arith.constant 0 : index
      %c0_20 = arith.constant 0 : index
      %23 = vector.load %arg7[%c0_19, %c0_20] : memref<256x128xf32, #tpu.memory_space<vmem>>, vector<256x128xf32>
      tpu.vector_store %arg7[%c0_19, %c0_20], %22 {strides = array<i32>} : memref<256x128xf32, #tpu.memory_space<vmem>>, vector<256x128xf32>,
    } else {
    }
    return
  }
  func.func @transform_0(%arg0: i32, %arg1: i32) -> (i32, i32) {
    %c0_i32 = arith.constant 0 : i32
    %c0_i32_0 = arith.constant 0 : i32
    return %arg0, %c0_i32 : i32, i32
  }
  func.func @transform_1(%arg0: i32, %arg1: i32) -> (i32, i32) {
    %c0_i32 = arith.constant 0 : i32
    %c0_i32_0 = arith.constant 0 : i32
    return %c0_i32, %arg1 : i32, i32
  }
  func.func @transform_2(%arg0: i32, %arg1: i32) -> (i32, i32) {
    %c0_i32 = arith.constant 0 : i32
    %c0_i32_0 = arith.constant 0 : i32
    return %c0_i32, %arg1 : i32, i32
  }
  func.func @transform_3(%arg0: i32, %arg1: i32) -> (i32, i32) {
    %c0_i32 = arith.constant 0 : i32
    %c0_i32_0 = arith.constant 0 : i32
    return %arg1, %c0_i32 : i32, i32
  }
  func.func @transform_4(%arg0: i32, %arg1: i32) -> (i32, i32) {
    %c0_i32 = arith.constant 0 : i32
    %c0_i32_0 = arith.constant 0 : i32
    %c0_i32_1 = arith.constant 0 : i32
    return %c0_i32, %c0_i32_0 : i32, i32
  }
  func.func @transform_5(%arg0: i32, %arg1: i32) -> (i32, i32) {
    %c0_i32 = arith.constant 0 : i32
    %c0_i32_0 = arith.constant 0 : i32
    return %arg0, %c0_i32 : i32, i32
  }
}

</mosaic_0001>

<llo_original>
// kernel: feed_forward_block.1
$region0: #{feed_forward_block.1}
  #allocation0 [shape = 'u32[]', space=smem, size = 0x4, offset = 0x4, fixed_abs, tag = 'smem constant byte address 0x4 - core index']
  #allocation1 [shape = 'u32[72,128]{1,0:T(1,128)}', space=vmem, size = 0x9000, scoped, tag = 'internal scratch']
  #allocation2 [shape = 'f32[256,128]{1,0:T(8,128)}', space=vmem, size = 0x20000, scoped, tag = 'scratch operand']
  %s0 = inlined_call_operand.hbm [shape: f32[256,128], index: 0, kind: input, shape index: {}]
  %s1 = inlined_call_operand.hbm [shape: f32[128,512], index: 1, kind: input, shape index: {}]
  %s2 = inlined_call_operand.vmem [shape: f32[1,512], index: 2, kind: input, shape index: {}]
  %s3 = inlined_call_operand.hbm [shape: f32[512,128], index: 3, kind: input, shape index: {}]
  %s4 = inlined_call_operand.vmem [shape: f32[1,128], index: 4, kind: input, shape index: {}]
  %s5 = inlined_call_operand.hbm [shape: f32[256,128], index: 5, kind: output, shape index: {}]
  %s6 = sld [smem:[#allocation0]]
  $region73: #{feed_forward_block.1} parent=0
    _
  %s8 = ssub.s32 1, %s6
  %s9 = scalar_select 0, %s8, %s6
  $region1: #{feed_forward_block.1} parent=0
    #allocation3 [shape = 'u8[131072]{0}', space=vmem, size = 0x20000, scoped, tag = 'input window, operand 0, single buffered']
    #allocation4 [shape = 's32[2]{0}', space=sflag, size = 0x8, scoped, tag = 'scoped memory for feed_forward_block.1']
    #allocation5 [shape = 's32[2]{0}', space=sflag, size = 0x8, scoped, tag = 'scoped memory for feed_forward_block.1']
    #allocation6 [shape = 'u8[262144]{0}', space=vmem, size = 0x40000, scoped, tag = 'input window, operand 1']
    #allocation7 [shape = 's32[2]{0}', space=sflag, size = 0x8, scoped, tag = 'scoped memory for feed_forward_block.1']
    #allocation8 [shape = 'u8[262144]{0}', space=vmem, size = 0x40000, scoped, tag = 'input window, operand 3']
    #allocation9 [shape = 'u8[131072]{0}', space=vmem, size = 0x20000, scoped, tag = 'output window, operand 0, single buffered']
    %10 = vsyncpa [#allocation4], 0
    %11 = vsyncpa [#allocation7], 0
    %s12 = scalar_lea.sflag [#allocation7], 1
    %13 = vsyncpa %s12, 0
    %14 = vsyncpa [#allocation5], 0
    loop: start=0, step=1, limit=4
    $region2: #{feed_forward_block.1} parent=1 // loop_pre_header
      _
    $region3: #{feed_forward_block.1} parent=1 // loop_header
      %s16 = sphi 0, %s20
      %p17 = scmp.ge.s32.totalorder %s16, 4
      %s23 = sphi 0, %s35
      %s24 = sphi 0, %s31
      %s25 = sphi 0, %s23
      %s26 = sphi 0, %s24
      %s27 = sphi 0, %s25
      %s28 = sphi 0, %s26
      %s38 = sphi 0, %s40
      %s41 = sphi 0, %s38
      %s42 = sphi 0, %s41
      %s58 = sphi 0, %s42
      %s64 = sphi 0, %s66
      %s67 = sphi 0, %s64
      %s68 = sphi 0, %s67
      %s84 = sphi 0, %s68
      %s90 = sphi 0, %s92
      %s93 = sphi 0, %s90
      %s94 = sphi 0, %s93
      %s110 = sphi 0, %s94
      %s116 = sphi 0, %s118
      %s119 = sphi 0, %s116
      %s120 = sphi 0, %s119
      %s136 = sphi 0, %s120
      %s140 = sphi 0, %s140
      %s142 = sphi 0, %s140
      %s143 = sphi 0, %s142
      %s157 = sphi 0, %s143
      %s163 = sphi 0, %s165
      %s166 = sphi 0, %s163
      %s167 = sphi 0, %s166
      %s183 = sphi 0, %s167
    $region4: #{feed_forward_block.1} parent=1 // loop_header_branch
      %19 = sbr.rel (%p17) target = $region8
    $region5: #{feed_forward_block.1} parent=1 // loop_body
      %s21 = ssub.s32 %s16, 1
      %s22 = ssub.s32 %s16, 2
      %s29 = sadd.s32 1, %s24
      %p30 = scmp.ge.s32.totalorder %s29, 2
      %s31 = scalar_select %p30, 0, %s29
      %s32 = sadd.s32 1, %s23
      %s33 = scalar_select %p30, %s32, %s23
      %p34 = scmp.ge.s32.totalorder %s33, 1
      %s35 = scalar_select %p34, 0, %s33
      %s36 = ssub.s32 %s23, %s35
      %p37 = scmp.eq.s32.totalorder %s36, 0
      %s39 = sadd.s32 %s38, 1
      %s40 = scalar_select %p37, %s38, %s39
      %p43 = pneg %p37
      %p44 = scmp.eq.s32.totalorder %s16, 1
      %p45 = por %p43, %p44
      %p46 = scmp.ne.s32.totalorder %s38, %s41
      %p47 = scmp.eq.s32.totalorder %s16, 0
      %p48 = por %p46, %p47
      %p49 = scmp.ne.s32.totalorder %s38, %s41
      %p50 = scmp.eq.s32.totalorder %s21, 1
      %p51 = por %p49, %p50
      %p52 = scmp.ne.s32.totalorder %s41, %s42
      %p53 = scmp.eq.s32.totalorder %s21, 0
      %p54 = por %p52, %p53
      %p55 = scmp.ne.s32.totalorder %s41, %s42
      %p56 = scmp.eq.s32.totalorder %s22, 1
      %p57 = por %p55, %p56
      %p59 = scmp.ne.s32.totalorder %s42, %s58
      %p60 = scmp.eq.s32.totalorder %s22, 0
      %p61 = por %p59, %p60
      %s62 = ssub.s32 %s24, %s31
      %p63 = scmp.eq.s32.totalorder %s62, 0
      %s65 = sadd.s32 %s64, 1
      %s66 = scalar_select %p63, %s64, %s65
      %p69 = pneg %p63
      %p70 = scmp.eq.s32.totalorder %s16, 1
      %p71 = por %p69, %p70
      %p72 = scmp.ne.s32.totalorder %s64, %s67
      %p73 = scmp.eq.s32.totalorder %s16, 0
      %p74 = por %p72, %p73
      %p75 = scmp.ne.s32.totalorder %s64, %s67
      %p76 = scmp.eq.s32.totalorder %s21, 1
      %p77 = por %p75, %p76
      %p78 = scmp.ne.s32.totalorder %s67, %s68
      %p79 = scmp.eq.s32.totalorder %s21, 0
      %p80 = por %p78, %p79
      %p81 = scmp.ne.s32.totalorder %s67, %s68
      %p82 = scmp.eq.s32.totalorder %s22, 1
      %p83 = por %p81, %p82
      %p85 = scmp.ne.s32.totalorder %s68, %s84
      %p86 = scmp.eq.s32.totalorder %s22, 0
      %p87 = por %p85, %p86
      %s88 = ssub.s32 %s24, %s31
      %p89 = scmp.eq.s32.totalorder %s88, 0
      %s91 = sadd.s32 %s90, 1
      %s92 = scalar_select %p89, %s90, %s91
      %p95 = pneg %p89
      %p96 = scmp.eq.s32.totalorder %s16, 1
      %p97 = por %p95, %p96
      %p98 = scmp.ne.s32.totalorder %s90, %s93
      %p99 = scmp.eq.s32.totalorder %s16, 0
      %p100 = por %p98, %p99
      %p101 = scmp.ne.s32.totalorder %s90, %s93
      %p102 = scmp.eq.s32.totalorder %s21, 1
      %p103 = por %p101, %p102
      %p104 = scmp.ne.s32.totalorder %s93, %s94
      %p105 = scmp.eq.s32.totalorder %s21, 0
      %p106 = por %p104, %p105
      %p107 = scmp.ne.s32.totalorder %s93, %s94
      %p108 = scmp.eq.s32.totalorder %s22, 1
      %p109 = por %p107, %p108
      %p111 = scmp.ne.s32.totalorder %s94, %s110
      %p112 = scmp.eq.s32.totalorder %s22, 0
      %p113 = por %p111, %p112
      %s114 = ssub.s32 %s24, %s31
      %p115 = scmp.eq.s32.totalorder %s114, 0
      %s117 = sadd.s32 %s116, 1
      %s118 = scalar_select %p115, %s116, %s117
      %p121 = pneg %p115
      %p122 = scmp.eq.s32.totalorder %s16, 1
      %p123 = por %p121, %p122
      %p124 = scmp.ne.s32.totalorder %s116, %s119
      %p125 = scmp.eq.s32.totalorder %s16, 0
      %p126 = por %p124, %p125
      %p127 = scmp.ne.s32.totalorder %s116, %s119
      %p128 = scmp.eq.s32.totalorder %s21, 1
      %p129 = por %p127, %p128
      %p130 = scmp.ne.s32.totalorder %s119, %s120
      %p131 = scmp.eq.s32.totalorder %s21, 0
      %p132 = por %p130, %p131
      %p133 = scmp.ne.s32.totalorder %s119, %s120
      %p134 = scmp.eq.s32.totalorder %s22, 1
      %p135 = por %p133, %p134
      %p137 = scmp.ne.s32.totalorder %s120, %s136
      %p138 = scmp.eq.s32.totalorder %s22, 0
      %p139 = por %p137, %p138
      %s141 = sadd.s32 %s140, 1
      %p144 = scmp.eq.s32.totalorder %s16, 1
      %p145 = scmp.ne.s32.totalorder %s140, %s142
      %p146 = scmp.eq.s32.totalorder %s16, 0
      %p147 = por %p145, %p146
      %p148 = scmp.ne.s32.totalorder %s140, %s142
      %p149 = scmp.eq.s32.totalorder %s21, 1
      %p150 = por %p148, %p149
      %p151 = scmp.ne.s32.totalorder %s142, %s143
      %p152 = scmp.eq.s32.totalorder %s21, 0
      %p153 = por %p151, %p152
      %p154 = scmp.ne.s32.totalorder %s142, %s143
      %p155 = scmp.eq.s32.totalorder %s22, 1
      %p156 = por %p154, %p155
      %p158 = scmp.ne.s32.totalorder %s143, %s157
      %p159 = scmp.eq.s32.totalorder %s22, 0
      %p160 = por %p158, %p159
      %s161 = ssub.s32 %s23, %s35
      %p162 = scmp.eq.s32.totalorder %s161, 0
      %s164 = sadd.s32 %s163, 1
      %s165 = scalar_select %p162, %s163, %s164
      %p168 = pneg %p162
      %p169 = scmp.eq.s32.totalorder %s16, 1
      %p170 = por %p168, %p169
      %p171 = scmp.ne.s32.totalorder %s163, %s166
      %p172 = scmp.eq.s32.totalorder %s16, 0
      %p173 = por %p171, %p172
      %p174 = scmp.ne.s32.totalorder %s163, %s166
      %p175 = scmp.eq.s32.totalorder %s21, 1
      %p176 = por %p174, %p175
      %p177 = scmp.ne.s32.totalorder %s166, %s167
      %p178 = scmp.eq.s32.totalorder %s21, 0
      %p179 = por %p177, %p178
      %p180 = scmp.ne.s32.totalorder %s166, %s167
      %p181 = scmp.eq.s32.totalorder %s22, 1
      %p182 = por %p180, %p181
      %p184 = scmp.ne.s32.totalorder %s167, %s183
      %p185 = scmp.eq.s32.totalorder %s22, 0
      %p186 = por %p184, %p185
      %p187 = scmp.le.s32.totalorder 1, %s16
      %p188 = scmp.lt.s32.totalorder %s16, 3
      %p189 = pnand %p187, %p188
      %p190 = pneg %p189
      // Predicated region
      $region9: #{feed_forward_block.1} parent=5 // pred_check
        _
      $region10: #{feed_forward_block.1} parent=5 // pred_check_branch
        %192 = sbr.rel (%p189) target = $region12
      $region11: #{feed_forward_block.1} parent=5 // pred_region
        %s193 = ssub.s32 %s16, 1
        // Predicated region
        $region13: #{feed_forward_block.1} parent=11 // pred_check
          %p194 = pneg %p54
        $region14: #{feed_forward_block.1} parent=11 // pred_check_branch
          %196 = sbr.rel (%p194) target = $region16
        $region15: #{feed_forward_block.1} parent=11 // pred_region
          %s197 = smul.u32 32, %s25
          %199 = vsyncadd [#allocation4], 0
          %s200 = smul.addr %s197, 8
          %s201 = scalar_lea.hbm %s0, %s200
          %s202 = sshll.u32 %s201, 4
          %s203 = int_to_ptr.hbm [resolvable:$true] %s202
          %s204 = sshll.u32 [#allocation3], 4
          %s205 = int_to_ptr.vmem [resolvable:$true] %s204
          %210 = dma.hbm_to_vmem [thread:$0]  %s203, 4096, %s205, [#allocation4], 128, 128, 8
        $region16: #{feed_forward_block.1} parent=11 // pred_fallthru
          _
        // Predicated region
        $region17: #{feed_forward_block.1} parent=11 // pred_check
          %p211 = pneg %p153
        $region18: #{feed_forward_block.1} parent=11 // pred_check_branch
          %213 = sbr.rel (%p211) target = $region20
        $region19: #{feed_forward_block.1} parent=11 // pred_region
          _
        $region20: #{feed_forward_block.1} parent=11 // pred_fallthru
          _
      $region12: #{feed_forward_block.1} parent=5 // pred_fallthru
        _
      %p214 = scmp.lt.s32.totalorder %s16, 2
      // Predicated region
      $region21: #{feed_forward_block.1} parent=5 // pred_check
        %p215 = pneg %p214
      $region22: #{feed_forward_block.1} parent=5 // pred_check_branch
        %217 = sbr.rel (%p215) target = $region24
      $region23: #{feed_forward_block.1} parent=5 // pred_region
        // Predicated region
        $region25: #{feed_forward_block.1} parent=23 // pred_check
          %p218 = pneg %p74
        $region26: #{feed_forward_block.1} parent=23 // pred_check_branch
          %220 = sbr.rel (%p218) target = $region28
        $region27: #{feed_forward_block.1} parent=23 // pred_region
          %s221 = sand.u32 %s16, 1
          %s222 = scalar_lea.sflag [#allocation7], %s221
          %s223 = sand.u32 %s64, 1
          %s224 = smul.addr %s223, 256
          %s225 = scalar_lea.vmem [#allocation6], %s224
          %s226 = smul.u32 2, %s24
          %228 = vsyncadd %s222, 0
          %s229 = smul.addr %s226, 8
          %s230 = scalar_lea.hbm %s1, %s229
          %s231 = sshll.u32 %s230, 4
          %s232 = int_to_ptr.hbm [resolvable:$true] %s231
          %s233 = sshll.u32 %s225, 4
          %s234 = int_to_ptr.vmem [resolvable:$true] %s233
          %239 = dma.hbm_to_vmem [thread:$0]  %s232, 4096, %s234, %s222, 512, 256, 16
        $region28: #{feed_forward_block.1} parent=23 // pred_fallthru
          _
        // Predicated region
        $region29: #{feed_forward_block.1} parent=23 // pred_check
          %p240 = pneg %p100
        $region30: #{feed_forward_block.1} parent=23 // pred_check_branch
          %242 = sbr.rel (%p240) target = $region32
        $region31: #{feed_forward_block.1} parent=23 // pred_region
          %s243 = smul.u32 2, %s24
          %p244 = scmp.lt.s32.totalorder %s243, 3
          %s245 = scalar_select %p244, %s243, 3
          %s246 = scalar_lea.vmem %s2, %s245
          %s247 = smul.u32 2, %s24
        $region32: #{feed_forward_block.1} parent=23 // pred_fallthru
          _
        // Predicated region
        $region33: #{feed_forward_block.1} parent=23 // pred_check
          %p248 = pneg %p126
        $region34: #{feed_forward_block.1} parent=23 // pred_check_branch
          %250 = sbr.rel (%p248) target = $region36
        $region35: #{feed_forward_block.1} parent=23 // pred_region
          %s251 = sand.u32 %s16, 1
          %s252 = scalar_lea.sflag [#allocation7], %s251
          %s253 = sand.u32 %s116, 1
          %s254 = smul.addr %s253, 256
          %s255 = scalar_lea.vmem [#allocation8], %s254
          %s256 = smul.u32 32, %s24
          %258 = vsyncadd %s252, 0
          %s259 = smul.addr %s256, 8
          %s260 = scalar_lea.hbm %s3, %s259
          %s261 = sshll.u32 %s260, 4
          %s262 = int_to_ptr.hbm [resolvable:$true] %s261
          %s263 = sshll.u32 %s255, 4
          %s264 = int_to_ptr.vmem [resolvable:$true] %s263
          %269 = dma.hbm_to_vmem [thread:$0]  %s262, 4096, %s264, %s252, 128, 128, 8
        $region36: #{feed_forward_block.1} parent=23 // pred_fallthru
          _
      $region24: #{feed_forward_block.1} parent=5 // pred_fallthru
        _
      %p270 = scmp.le.s32.totalorder 1, %s16
      %p271 = scmp.lt.s32.totalorder %s16, 3
      %p272 = pnand %p270, %p271
      %p273 = pneg %p272
      // Predicated region
      $region37: #{feed_forward_block.1} parent=5 // pred_check
        _
      $region38: #{feed_forward_block.1} parent=5 // pred_check_branch
        %275 = sbr.rel (%p272) target = $region40
      $region39: #{feed_forward_block.1} parent=5 // pred_region
        %s276 = ssub.s32 %s16, 1
        // Predicated region
        $region41: #{feed_forward_block.1} parent=39 // pred_check
          %p277 = pneg %p54
        $region42: #{feed_forward_block.1} parent=39 // pred_check_branch
          %279 = sbr.rel (%p277) target = $region44
        $region43: #{feed_forward_block.1} parent=39 // pred_region
          %281 = dma.done [#allocation4], 4096
        $region44: #{feed_forward_block.1} parent=39 // pred_fallthru
          _
        %s282 = sand.u32 %s21, 1
        %s283 = scalar_lea.sflag [#allocation7], %s282
        %s284 = sand.u32 %s67, 1
        %s285 = smul.addr %s284, 256
        %s286 = scalar_lea.vmem [#allocation6], %s285
        // Predicated region
        $region45: #{feed_forward_block.1} parent=39 // pred_check
          %p287 = pneg %p80
        $region46: #{feed_forward_block.1} parent=39 // pred_check_branch
          %289 = sbr.rel (%p287) target = $region48
        $region47: #{feed_forward_block.1} parent=39 // pred_region
          %291 = dma.done %s283, 4096
        $region48: #{feed_forward_block.1} parent=39 // pred_fallthru
          _
        %s292 = sand.u32 %s21, 1
        %s293 = scalar_lea.sflag [#allocation7], %s292
        %s294 = sand.u32 %s119, 1
        %s295 = smul.addr %s294, 256
        %s296 = scalar_lea.vmem [#allocation8], %s295
        // Predicated region
        $region49: #{feed_forward_block.1} parent=39 // pred_check
          %p297 = pneg %p132
        $region50: #{feed_forward_block.1} parent=39 // pred_check_branch
          %299 = sbr.rel (%p297) target = $region52
        $region51: #{feed_forward_block.1} parent=39 // pred_region
          %301 = dma.done %s293, 4096
        $region52: #{feed_forward_block.1} parent=39 // pred_fallthru
          _
        %p302 = pneg %p54
        %p303 = pneg %p51
        %s304 = sand.u32 %s21, 1
        %s305 = scalar_lea.sflag [#allocation7], %s304
        %s306 = sand.u32 %s67, 1
        %s307 = smul.addr %s306, 256
        %s308 = scalar_lea.vmem [#allocation6], %s307
        %p309 = pneg %p80
        %p310 = pneg %p77
        %s311 = smul.u32 2, %s26
        %p312 = scmp.lt.s32.totalorder %s311, 3
        %s313 = scalar_select %p312, %s311, 3
        %s314 = scalar_lea.vmem %s2, %s313
        %p315 = pneg %p106
        %p316 = pneg %p103
        %s317 = sand.u32 %s21, 1
        %s318 = scalar_lea.sflag [#allocation7], %s317
        %s319 = sand.u32 %s119, 1
        %s320 = smul.addr %s319, 256
        %s321 = scalar_lea.vmem [#allocation8], %s320
        %p322 = pneg %p132
        %p323 = pneg %p129
        %p324 = pneg %p153
        %p325 = pneg %p150
        %p326 = pneg %p179
        %p327 = pneg %p176
        %s328 = smul.u32 32, %s25
        %s329 = smul.u32 2, %s26
        %s330 = smul.u32 2, %s26
        %p331 = scmp.lt.s32.totalorder %s330, 3
        %s332 = scalar_select %p331, %s330, 3
        %s333 = scalar_lea.vmem %s2, %s332
        %s334 = smul.u32 2, %s26
        %s335 = smul.u32 32, %s26
        %s336 = smul.u32 32, %s25
        %p337 = scmp.eq.s32.totalorder %s26, 0
        // Predicated region
        $region53: #{feed_forward_block.1} parent=39 // pred_check
          %p338 = pneg %p337
        $region54: #{feed_forward_block.1} parent=39 // pred_check_branch
          %340 = sbr.rel (%p338) target = $region56
        $region55: #{feed_forward_block.1} parent=39 // pred_region
          %341 = vst [vmem:[#allocation2] sm:$0xff] 0.0
          %342 = vst [vmem:[#allocation2 + $0x8] sm:$0xff] 0.0
          %343 = vst [vmem:[#allocation2 + $0x10] sm:$0xff] 0.0
          %344 = vst [vmem:[#allocation2 + $0x18] sm:$0xff] 0.0
          %345 = vst [vmem:[#allocation2 + $0x20] sm:$0xff] 0.0
          %346 = vst [vmem:[#allocation2 + $0x28] sm:$0xff] 0.0
          %347 = vst [vmem:[#allocation2 + $0x30] sm:$0xff] 0.0
          %348 = vst [vmem:[#allocation2 + $0x38] sm:$0xff] 0.0
          %349 = vst [vmem:[#allocation2 + $0x40] sm:$0xff] 0.0
          %350 = vst [vmem:[#allocation2 + $0x48] sm:$0xff] 0.0
          %351 = vst [vmem:[#allocation2 + $0x50] sm:$0xff] 0.0
          %352 = vst [vmem:[#allocation2 + $0x58] sm:$0xff] 0.0
          %353 = vst [vmem:[#allocation2 + $0x60] sm:$0xff] 0.0
          %354 = vst [vmem:[#allocation2 + $0x68] sm:$0xff] 0.0
          %355 = vst [vmem:[#allocation2 + $0x70] sm:$0xff] 0.0
          %356 = vst [vmem:[#allocation2 + $0x78] sm:$0xff] 0.0
          %357 = vst [vmem:[#allocation2 + $0x80] sm:$0xff] 0.0
          %358 = vst [vmem:[#allocation2 + $0x88] sm:$0xff] 0.0
          %359 = vst [vmem:[#allocation2 + $0x90] sm:$0xff] 0.0
          %360 = vst [vmem:[#allocation2 + $0x98] sm:$0xff] 0.0
          %361 = vst [vmem:[#allocation2 + $0xa0] sm:$0xff] 0.0
          %362 = vst [vmem:[#allocation2 + $0xa8] sm:$0xff] 0.0
          %363 = vst [vmem:[#allocation2 + $0xb0] sm:$0xff] 0.0
          %364 = vst [vmem:[#allocation2 + $0xb8] sm:$0xff] 0.0
          %365 = vst [vmem:[#allocation2 + $0xc0] sm:$0xff] 0.0
          %366 = vst [vmem:[#allocation2 + $0xc8] sm:$0xff] 0.0
          %367 = vst [vmem:[#allocation2 + $0xd0] sm:$0xff] 0.0
          %368 = vst [vmem:[#allocation2 + $0xd8] sm:$0xff] 0.0
          %369 = vst [vmem:[#allocation2 + $0xe0] sm:$0xff] 0.0
          %370 = vst [vmem:[#allocation2 + $0xe8] sm:$0xff] 0.0
          %371 = vst [vmem:[#allocation2 + $0xf0] sm:$0xff] 0.0
          %372 = vst [vmem:[#allocation2 + $0xf8] sm:$0xff] 0.0
        $region56: #{feed_forward_block.1} parent=39 // pred_fallthru
          _
        %v373 = vld [vmem:[#allocation3] sm:$0xff]
        %v374 = vld [vmem:[#allocation3 + $0x8] sm:$0xff]
        %v375 = vld [vmem:[#allocation3 + $0x10] sm:$0xff]
        %v376 = vld [vmem:[#allocation3 + $0x18] sm:$0xff]
        %v377 = vld [vmem:[#allocation3 + $0x20] sm:$0xff]
        %v378 = vld [vmem:[#allocation3 + $0x28] sm:$0xff]
        %v379 = vld [vmem:[#allocation3 + $0x30] sm:$0xff]
        %v380 = vld [vmem:[#allocation3 + $0x38] sm:$0xff]
        %v381 = vld [vmem:[#allocation3 + $0x40] sm:$0xff]
        %v382 = vld [vmem:[#allocation3 + $0x48] sm:$0xff]
        %v383 = vld [vmem:[#allocation3 + $0x50] sm:$0xff]
        %v384 = vld [vmem:[#allocation3 + $0x58] sm:$0xff]
        %v385 = vld [vmem:[#allocation3 + $0x60] sm:$0xff]
        %v386 = vld [vmem:[#allocation3 + $0x68] sm:$0xff]
        %v387 = vld [vmem:[#allocation3 + $0x70] sm:$0xff]
        %v388 = vld [vmem:[#allocation3 + $0x78] sm:$0xff]
        %v389 = vld [vmem:[#allocation3 + $0x80] sm:$0xff]
        %v390 = vld [vmem:[#allocation3 + $0x88] sm:$0xff]
        %v391 = vld [vmem:[#allocation3 + $0x90] sm:$0xff]
        %v392 = vld [vmem:[#allocation3 + $0x98] sm:$0xff]
        %v393 = vld [vmem:[#allocation3 + $0xa0] sm:$0xff]
        %v394 = vld [vmem:[#allocation3 + $0xa8] sm:$0xff]
        %v395 = vld [vmem:[#allocation3 + $0xb0] sm:$0xff]
        %v396 = vld [vmem:[#allocation3 + $0xb8] sm:$0xff]
        %v397 = vld [vmem:[#allocation3 + $0xc0] sm:$0xff]
        %v398 = vld [vmem:[#allocation3 + $0xc8] sm:$0xff]
        %v399 = vld [vmem:[#allocation3 + $0xd0] sm:$0xff]
        %v400 = vld [vmem:[#allocation3 + $0xd8] sm:$0xff]
        %v401 = vld [vmem:[#allocation3 + $0xe0] sm:$0xff]
        %v402 = vld [vmem:[#allocation3 + $0xe8] sm:$0xff]
        %v403 = vld [vmem:[#allocation3 + $0xf0] sm:$0xff]
        %v404 = vld [vmem:[#allocation3 + $0xf8] sm:$0xff]
        %v405 = vld [vmem:[%s286] sm:$0xff]
        %v406 = vld [vmem:[%s286 + $0x8] sm:$0xff]
        %v407 = vld [vmem:[%s286 + $0x10] sm:$0xff]
        %v408 = vld [vmem:[%s286 + $0x18] sm:$0xff]
        %v409 = vld [vmem:[%s286 + $0x20] sm:$0xff]
        %v410 = vld [vmem:[%s286 + $0x28] sm:$0xff]
        %v411 = vld [vmem:[%s286 + $0x30] sm:$0xff]
        %v412 = vld [vmem:[%s286 + $0x38] sm:$0xff]
        %v413 = vld [vmem:[%s286 + $0x40] sm:$0xff]
        %v414 = vld [vmem:[%s286 + $0x48] sm:$0xff]
        %v415 = vld [vmem:[%s286 + $0x50] sm:$0xff]
        %v416 = vld [vmem:[%s286 + $0x58] sm:$0xff]
        %v417 = vld [vmem:[%s286 + $0x60] sm:$0xff]
        %v418 = vld [vmem:[%s286 + $0x68] sm:$0xff]
        %v419 = vld [vmem:[%s286 + $0x70] sm:$0xff]
        %v420 = vld [vmem:[%s286 + $0x78] sm:$0xff]
        %v421 = vld [vmem:[%s286 + $0x80] sm:$0xff]
        %v422 = vld [vmem:[%s286 + $0x88] sm:$0xff]
        %v423 = vld [vmem:[%s286 + $0x90] sm:$0xff]
        %v424 = vld [vmem:[%s286 + $0x98] sm:$0xff]
        %v425 = vld [vmem:[%s286 + $0xa0] sm:$0xff]
        %v426 = vld [vmem:[%s286 + $0xa8] sm:$0xff]
        %v427 = vld [vmem:[%s286 + $0xb0] sm:$0xff]
        %v428 = vld [vmem:[%s286 + $0xb8] sm:$0xff]
        %v429 = vld [vmem:[%s286 + $0xc0] sm:$0xff]
        %v430 = vld [vmem:[%s286 + $0xc8] sm:$0xff]
        %v431 = vld [vmem:[%s286 + $0xd0] sm:$0xff]
        %v432 = vld [vmem:[%s286 + $0xd8] sm:$0xff]
        %v433 = vld [vmem:[%s286 + $0xe0] sm:$0xff]
        %v434 = vld [vmem:[%s286 + $0xe8] sm:$0xff]
        %v435 = vld [vmem:[%s286 + $0xf0] sm:$0xff]
        %v436 = vld [vmem:[%s286 + $0xf8] sm:$0xff]
        %v437 = vld [vmem:[%s333] sm:$0x3]
        %v439 = vperm.slane %v437, 0
        %v440 = vperm.slane %v437, 1
        %443 = vmatpush.msra.mxu0 %v435
        %444 = vmatpush.msra.mxu0 %v433
        %445 = vmatpush.msra.mxu0 %v431
        %446 = vmatpush.msra.mxu0 %v429
        %447 = vmatpush.msra.mxu0 %v427
        %448 = vmatpush.msra.mxu0 %v425
        %449 = vmatpush.msra.mxu0 %v423
        %450 = vmatpush.msra.mxu0 %v421
        %451 = vmatpush.msra.mxu0 %v419
        %452 = vmatpush.msra.mxu0 %v417
        %453 = vmatpush.msra.mxu0 %v415
        %454 = vmatpush.msra.mxu0 %v413
        %455 = vmatpush.msra.mxu0 %v411
        %456 = vmatpush.msra.mxu0 %v409
        %457 = vmatpush.msra.mxu0 %v407
        %458 = vmatpush.msra.mxu0 %v405
        %459 = vmatmul.f32.gmra.mxu0 %v373
        %v460 = vpop.f32.mrf.mxu0
        %v461 = vadd.f32 %v439, %v460
        %462 = vmatmul.f32.gmra.mxu0 %v374
        %v463 = vpop.f32.mrf.mxu0
        %v464 = vadd.f32 %v439, %v463
        %465 = vmatmul.f32.gmra.mxu0 %v375
        %v466 = vpop.f32.mrf.mxu0
        %v467 = vadd.f32 %v439, %v466
        %468 = vmatmul.f32.gmra.mxu0 %v376
        %v469 = vpop.f32.mrf.mxu0
        %v470 = vadd.f32 %v439, %v469
        %471 = vmatmul.f32.gmra.mxu0 %v377
        %v472 = vpop.f32.mrf.mxu0
        %v473 = vadd.f32 %v439, %v472
        %474 = vmatmul.f32.gmra.mxu0 %v378
        %v475 = vpop.f32.mrf.mxu0
        %v476 = vadd.f32 %v439, %v475
        %477 = vmatmul.f32.gmra.mxu0 %v379
        %v478 = vpop.f32.mrf.mxu0
        %v479 = vadd.f32 %v439, %v478
        %480 = vmatmul.f32.gmra.mxu0 %v380
        %v481 = vpop.f32.mrf.mxu0
        %v482 = vadd.f32 %v439, %v481
        %483 = vmatmul.f32.gmra.mxu0 %v381
        %v484 = vpop.f32.mrf.mxu0
        %v485 = vadd.f32 %v439, %v484
        %486 = vmatmul.f32.gmra.mxu0 %v382
        %v487 = vpop.f32.mrf.mxu0
        %v488 = vadd.f32 %v439, %v487
        %489 = vmatmul.f32.gmra.mxu0 %v383
        %v490 = vpop.f32.mrf.mxu0
        %v491 = vadd.f32 %v439, %v490
        %492 = vmatmul.f32.gmra.mxu0 %v384
        %v493 = vpop.f32.mrf.mxu0
        %v494 = vadd.f32 %v439, %v493
        %495 = vmatmul.f32.gmra.mxu0 %v385
        %v496 = vpop.f32.mrf.mxu0
        %v497 = vadd.f32 %v439, %v496
        %498 = vmatmul.f32.gmra.mxu0 %v386
        %v499 = vpop.f32.mrf.mxu0
        %v500 = vadd.f32 %v439, %v499
        %501 = vmatmul.f32.gmra.mxu0 %v387
        %v502 = vpop.f32.mrf.mxu0
        %v503 = vadd.f32 %v439, %v502
        %504 = vmatmul.f32.gmra.mxu0 %v388
        %v505 = vpop.f32.mrf.mxu0
        %v506 = vadd.f32 %v439, %v505
        %507 = vmatmul.f32.gmra.mxu0 %v389
        %v508 = vpop.f32.mrf.mxu0
        %v509 = vadd.f32 %v439, %v508
        %510 = vmatmul.f32.gmra.mxu0 %v390
        %v511 = vpop.f32.mrf.mxu0
        %v512 = vadd.f32 %v439, %v511
        %513 = vmatmul.f32.gmra.mxu0 %v391
        %v514 = vpop.f32.mrf.mxu0
        %v515 = vadd.f32 %v439, %v514
        %516 = vmatmul.f32.gmra.mxu0 %v392
        %v517 = vpop.f32.mrf.mxu0
        %v518 = vadd.f32 %v439, %v517
        %519 = vmatmul.f32.gmra.mxu0 %v393
        %v520 = vpop.f32.mrf.mxu0
        %v521 = vadd.f32 %v439, %v520
        %522 = vmatmul.f32.gmra.mxu0 %v394
        %v523 = vpop.f32.mrf.mxu0
        %v524 = vadd.f32 %v439, %v523
        %525 = vmatmul.f32.gmra.mxu0 %v395
        %v526 = vpop.f32.mrf.mxu0
        %v527 = vadd.f32 %v439, %v526
        %528 = vmatmul.f32.gmra.mxu0 %v396
        %v529 = vpop.f32.mrf.mxu0
        %v530 = vadd.f32 %v439, %v529
        %531 = vmatmul.f32.gmra.mxu0 %v397
        %v532 = vpop.f32.mrf.mxu0
        %v533 = vadd.f32 %v439, %v532
        %534 = vmatmul.f32.gmra.mxu0 %v398
        %v535 = vpop.f32.mrf.mxu0
        %v536 = vadd.f32 %v439, %v535
        %537 = vmatmul.f32.gmra.mxu0 %v399
        %v538 = vpop.f32.mrf.mxu0
        %v539 = vadd.f32 %v439, %v538
        %540 = vmatmul.f32.gmra.mxu0 %v400
        %v541 = vpop.f32.mrf.mxu0
        %v542 = vadd.f32 %v439, %v541
        %543 = vmatmul.f32.gmra.mxu0 %v401
        %v544 = vpop.f32.mrf.mxu0
        %v545 = vadd.f32 %v439, %v544
        %546 = vmatmul.f32.gmra.mxu0 %v402
        %v547 = vpop.f32.mrf.mxu0
        %v548 = vadd.f32 %v439, %v547
        %549 = vmatmul.f32.gmra.mxu0 %v403
        %v550 = vpop.f32.mrf.mxu0
        %v551 = vadd.f32 %v439, %v550
        %552 = vmatmul.f32.gmra.mxu0 %v404
        %v553 = vpop.f32.mrf.mxu0
        %v554 = vadd.f32 %v439, %v553
        %555 = vdwg.mxu0
        %556 = vmatpush.msra.mxu0 %v436
        %557 = vmatpush.msra.mxu0 %v434
        %558 = vmatpush.msra.mxu0 %v432
        %559 = vmatpush.msra.mxu0 %v430
        %560 = vmatpush.msra.mxu0 %v428
        %561 = vmatpush.msra.mxu0 %v426
        %562 = vmatpush.msra.mxu0 %v424
        %563 = vmatpush.msra.mxu0 %v422
        %564 = vmatpush.msra.mxu0 %v420
        %565 = vmatpush.msra.mxu0 %v418
        %566 = vmatpush.msra.mxu0 %v416
        %567 = vmatpush.msra.mxu0 %v414
        %568 = vmatpush.msra.mxu0 %v412
        %569 = vmatpush.msra.mxu0 %v410
        %570 = vmatpush.msra.mxu0 %v408
        %571 = vmatpush.msra.mxu0 %v406
        %572 = vmatmul.f32.gmra.mxu0 %v373
        %v573 = vpop.f32.mrf.mxu0
        %v574 = vadd.f32 %v440, %v573
        %575 = vmatmul.f32.gmra.mxu0 %v374
        %v576 = vpop.f32.mrf.mxu0
        %v577 = vadd.f32 %v440, %v576
        %578 = vmatmul.f32.gmra.mxu0 %v375
        %v579 = vpop.f32.mrf.mxu0
        %v580 = vadd.f32 %v440, %v579
        %581 = vmatmul.f32.gmra.mxu0 %v376
        %v582 = vpop.f32.mrf.mxu0
        %v583 = vadd.f32 %v440, %v582
        %584 = vmatmul.f32.gmra.mxu0 %v377
        %v585 = vpop.f32.mrf.mxu0
        %v586 = vadd.f32 %v440, %v585
        %587 = vmatmul.f32.gmra.mxu0 %v378
        %v588 = vpop.f32.mrf.mxu0
        %v589 = vadd.f32 %v440, %v588
        %590 = vmatmul.f32.gmra.mxu0 %v379
        %v591 = vpop.f32.mrf.mxu0
        %v592 = vadd.f32 %v440, %v591
        %593 = vmatmul.f32.gmra.mxu0 %v380
        %v594 = vpop.f32.mrf.mxu0
        %v595 = vadd.f32 %v440, %v594
        %596 = vmatmul.f32.gmra.mxu0 %v381
        %v597 = vpop.f32.mrf.mxu0
        %v598 = vadd.f32 %v440, %v597
        %599 = vmatmul.f32.gmra.mxu0 %v382
        %v600 = vpop.f32.mrf.mxu0
        %v601 = vadd.f32 %v440, %v600
        %602 = vmatmul.f32.gmra.mxu0 %v383
        %v603 = vpop.f32.mrf.mxu0
        %v604 = vadd.f32 %v440, %v603
        %605 = vmatmul.f32.gmra.mxu0 %v384
        %v606 = vpop.f32.mrf.mxu0
        %v607 = vadd.f32 %v440, %v606
        %608 = vmatmul.f32.gmra.mxu0 %v385
        %v609 = vpop.f32.mrf.mxu0
        %v610 = vadd.f32 %v440, %v609
        %611 = vmatmul.f32.gmra.mxu0 %v386
        %v612 = vpop.f32.mrf.mxu0
        %v613 = vadd.f32 %v440, %v612
        %614 = vmatmul.f32.gmra.mxu0 %v387
        %v615 = vpop.f32.mrf.mxu0
        %v616 = vadd.f32 %v440, %v615
        %617 = vmatmul.f32.gmra.mxu0 %v388
        %v618 = vpop.f32.mrf.mxu0
        %v619 = vadd.f32 %v440, %v618
        %620 = vmatmul.f32.gmra.mxu0 %v389
        %v621 = vpop.f32.mrf.mxu0
        %v622 = vadd.f32 %v440, %v621
        %623 = vmatmul.f32.gmra.mxu0 %v390
        %v624 = vpop.f32.mrf.mxu0
        %v625 = vadd.f32 %v440, %v624
        %626 = vmatmul.f32.gmra.mxu0 %v391
        %v627 = vpop.f32.mrf.mxu0
        %v628 = vadd.f32 %v440, %v627
        %629 = vmatmul.f32.gmra.mxu0 %v392
        %v630 = vpop.f32.mrf.mxu0
        %v631 = vadd.f32 %v440, %v630
        %632 = vmatmul.f32.gmra.mxu0 %v393
        %v633 = vpop.f32.mrf.mxu0
        %v634 = vadd.f32 %v440, %v633
        %635 = vmatmul.f32.gmra.mxu0 %v394
        %v636 = vpop.f32.mrf.mxu0
        %v637 = vadd.f32 %v440, %v636
        %638 = vmatmul.f32.gmra.mxu0 %v395
        %v639 = vpop.f32.mrf.mxu0
        %v640 = vadd.f32 %v440, %v639
        %641 = vmatmul.f32.gmra.mxu0 %v396
        %v642 = vpop.f32.mrf.mxu0
        %v643 = vadd.f32 %v440, %v642
        %644 = vmatmul.f32.gmra.mxu0 %v397
        %v645 = vpop.f32.mrf.mxu0
        %v646 = vadd.f32 %v440, %v645
        %647 = vmatmul.f32.gmra.mxu0 %v398
        %v648 = vpop.f32.mrf.mxu0
        %v649 = vadd.f32 %v440, %v648
        %650 = vmatmul.f32.gmra.mxu0 %v399
        %v651 = vpop.f32.mrf.mxu0
        %v652 = vadd.f32 %v440, %v651
        %653 = vmatmul.f32.gmra.mxu0 %v400
        %v654 = vpop.f32.mrf.mxu0
        %v655 = vadd.f32 %v440, %v654
        %656 = vmatmul.f32.gmra.mxu0 %v401
        %v657 = vpop.f32.mrf.mxu0
        %v658 = vadd.f32 %v440, %v657
        %659 = vmatmul.f32.gmra.mxu0 %v402
        %v660 = vpop.f32.mrf.mxu0
        %v661 = vadd.f32 %v440, %v660
        %662 = vmatmul.f32.gmra.mxu0 %v403
        %v663 = vpop.f32.mrf.mxu0
        %v664 = vadd.f32 %v440, %v663
        %665 = vmatmul.f32.gmra.mxu0 %v404
        %v666 = vpop.f32.mrf.mxu0
        %v667 = vadd.f32 %v440, %v666
        %668 = vdwg.mxu0
        %v669 = vmax.f32 %v461, 0.0
        %v670 = vmax.f32 %v574, 0.0
        %v671 = vmax.f32 %v464, 0.0
        %v672 = vmax.f32 %v577, 0.0
        %v673 = vmax.f32 %v467, 0.0
        %v674 = vmax.f32 %v580, 0.0
        %v675 = vmax.f32 %v470, 0.0
        %v676 = vmax.f32 %v583, 0.0
        %v677 = vmax.f32 %v473, 0.0
        %v678 = vmax.f32 %v586, 0.0
        %v679 = vmax.f32 %v476, 0.0
        %v680 = vmax.f32 %v589, 0.0
        %v681 = vmax.f32 %v479, 0.0
        %v682 = vmax.f32 %v592, 0.0
        %v683 = vmax.f32 %v482, 0.0
        %v684 = vmax.f32 %v595, 0.0
        %v685 = vmax.f32 %v485, 0.0
        %v686 = vmax.f32 %v598, 0.0
        %v687 = vmax.f32 %v488, 0.0
        %v688 = vmax.f32 %v601, 0.0
        %v689 = vmax.f32 %v491, 0.0
        %v690 = vmax.f32 %v604, 0.0
        %v691 = vmax.f32 %v494, 0.0
        %v692 = vmax.f32 %v607, 0.0
        %v693 = vmax.f32 %v497, 0.0
        %v694 = vmax.f32 %v610, 0.0
        %v695 = vmax.f32 %v500, 0.0
        %v696 = vmax.f32 %v613, 0.0
        %v697 = vmax.f32 %v503, 0.0
        %v698 = vmax.f32 %v616, 0.0
        %v699 = vmax.f32 %v506, 0.0
        %v700 = vmax.f32 %v619, 0.0
        %v701 = vmax.f32 %v509, 0.0
        %v702 = vmax.f32 %v622, 0.0
        %v703 = vmax.f32 %v512, 0.0
        %v704 = vmax.f32 %v625, 0.0
        %v705 = vmax.f32 %v515, 0.0
        %v706 = vmax.f32 %v628, 0.0
        %v707 = vmax.f32 %v518, 0.0
        %v708 = vmax.f32 %v631, 0.0
        %v709 = vmax.f32 %v521, 0.0
        %v710 = vmax.f32 %v634, 0.0
        %v711 = vmax.f32 %v524, 0.0
        %v712 = vmax.f32 %v637, 0.0
        %v713 = vmax.f32 %v527, 0.0
        %v714 = vmax.f32 %v640, 0.0
        %v715 = vmax.f32 %v530, 0.0
        %v716 = vmax.f32 %v643, 0.0
        %v717 = vmax.f32 %v533, 0.0
        %v718 = vmax.f32 %v646, 0.0
        %v719 = vmax.f32 %v536, 0.0
        %v720 = vmax.f32 %v649, 0.0
        %v721 = vmax.f32 %v539, 0.0
        %v722 = vmax.f32 %v652, 0.0
        %v723 = vmax.f32 %v542, 0.0
        %v724 = vmax.f32 %v655, 0.0
        %v725 = vmax.f32 %v545, 0.0
        %v726 = vmax.f32 %v658, 0.0
        %v727 = vmax.f32 %v548, 0.0
        %v728 = vmax.f32 %v661, 0.0
        %v729 = vmax.f32 %v551, 0.0
        %v730 = vmax.f32 %v664, 0.0
        %v731 = vmax.f32 %v554, 0.0
        %v732 = vmax.f32 %v667, 0.0
        %v733 = vld [vmem:[#allocation2] sm:$0xff]
        %v734 = vld [vmem:[#allocation2 + $0x8] sm:$0xff]
        %v735 = vld [vmem:[#allocation2 + $0x10] sm:$0xff]
        %v736 = vld [vmem:[#allocation2 + $0x18] sm:$0xff]
        %v737 = vld [vmem:[#allocation2 + $0x20] sm:$0xff]
        %v738 = vld [vmem:[#allocation2 + $0x28] sm:$0xff]
        %v739 = vld [vmem:[#allocation2 + $0x30] sm:$0xff]
        %v740 = vld [vmem:[#allocation2 + $0x38] sm:$0xff]
        %v741 = vld [vmem:[#allocation2 + $0x40] sm:$0xff]
        %v742 = vld [vmem:[#allocation2 + $0x48] sm:$0xff]
        %v743 = vld [vmem:[#allocation2 + $0x50] sm:$0xff]
        %v744 = vld [vmem:[#allocation2 + $0x58] sm:$0xff]
        %v745 = vld [vmem:[#allocation2 + $0x60] sm:$0xff]
        %v746 = vld [vmem:[#allocation2 + $0x68] sm:$0xff]
        %v747 = vld [vmem:[#allocation2 + $0x70] sm:$0xff]
        %v748 = vld [vmem:[#allocation2 + $0x78] sm:$0xff]
        %v749 = vld [vmem:[#allocation2 + $0x80] sm:$0xff]
        %v750 = vld [vmem:[#allocation2 + $0x88] sm:$0xff]
        %v751 = vld [vmem:[#allocation2 + $0x90] sm:$0xff]
        %v752 = vld [vmem:[#allocation2 + $0x98] sm:$0xff]
        %v753 = vld [vmem:[#allocation2 + $0xa0] sm:$0xff]
        %v754 = vld [vmem:[#allocation2 + $0xa8] sm:$0xff]
        %v755 = vld [vmem:[#allocation2 + $0xb0] sm:$0xff]
        %v756 = vld [vmem:[#allocation2 + $0xb8] sm:$0xff]
        %v757 = vld [vmem:[#allocation2 + $0xc0] sm:$0xff]
        %v758 = vld [vmem:[#allocation2 + $0xc8] sm:$0xff]
        %v759 = vld [vmem:[#allocation2 + $0xd0] sm:$0xff]
        %v760 = vld [vmem:[#allocation2 + $0xd8] sm:$0xff]
        %v761 = vld [vmem:[#allocation2 + $0xe0] sm:$0xff]
        %v762 = vld [vmem:[#allocation2 + $0xe8] sm:$0xff]
        %v763 = vld [vmem:[#allocation2 + $0xf0] sm:$0xff]
        %v764 = vld [vmem:[#allocation2 + $0xf8] sm:$0xff]
        %v765 = vld [vmem:[%s296] sm:$0xff]
        %v766 = vld [vmem:[%s296 + $0x8] sm:$0xff]
        %v767 = vld [vmem:[%s296 + $0x10] sm:$0xff]
        %v768 = vld [vmem:[%s296 + $0x18] sm:$0xff]
        %v769 = vld [vmem:[%s296 + $0x20] sm:$0xff]
        %v770 = vld [vmem:[%s296 + $0x28] sm:$0xff]
        %v771 = vld [vmem:[%s296 + $0x30] sm:$0xff]
        %v772 = vld [vmem:[%s296 + $0x38] sm:$0xff]
        %v773 = vld [vmem:[%s296 + $0x40] sm:$0xff]
        %v774 = vld [vmem:[%s296 + $0x48] sm:$0xff]
        %v775 = vld [vmem:[%s296 + $0x50] sm:$0xff]
        %v776 = vld [vmem:[%s296 + $0x58] sm:$0xff]
        %v777 = vld [vmem:[%s296 + $0x60] sm:$0xff]
        %v778 = vld [vmem:[%s296 + $0x68] sm:$0xff]
        %v779 = vld [vmem:[%s296 + $0x70] sm:$0xff]
        %v780 = vld [vmem:[%s296 + $0x78] sm:$0xff]
        %v781 = vld [vmem:[%s296 + $0x80] sm:$0xff]
        %v782 = vld [vmem:[%s296 + $0x88] sm:$0xff]
        %v783 = vld [vmem:[%s296 + $0x90] sm:$0xff]
        %v784 = vld [vmem:[%s296 + $0x98] sm:$0xff]
        %v785 = vld [vmem:[%s296 + $0xa0] sm:$0xff]
        %v786 = vld [vmem:[%s296 + $0xa8] sm:$0xff]
        %v787 = vld [vmem:[%s296 + $0xb0] sm:$0xff]
        %v788 = vld [vmem:[%s296 + $0xb8] sm:$0xff]
        %v789 = vld [vmem:[%s296 + $0xc0] sm:$0xff]
        %v790 = vld [vmem:[%s296 + $0xc8] sm:$0xff]
        %v791 = vld [vmem:[%s296 + $0xd0] sm:$0xff]
        %v792 = vld [vmem:[%s296 + $0xd8] sm:$0xff]
        %v793 = vld [vmem:[%s296 + $0xe0] sm:$0xff]
        %v794 = vld [vmem:[%s296 + $0xe8] sm:$0xff]
        %v795 = vld [vmem:[%s296 + $0xf0] sm:$0xff]
        %v796 = vld [vmem:[%s296 + $0xf8] sm:$0xff]
        %797 = vmatpush.msra.mxu0 %v780
        %798 = vmatpush.msra.mxu0 %v779
        %799 = vmatpush.msra.mxu0 %v778
        %800 = vmatpush.msra.mxu0 %v777
        %801 = vmatpush.msra.mxu0 %v776
        %802 = vmatpush.msra.mxu0 %v775
        %803 = vmatpush.msra.mxu0 %v774
        %804 = vmatpush.msra.mxu0 %v773
        %805 = vmatpush.msra.mxu0 %v772
        %806 = vmatpush.msra.mxu0 %v771
        %807 = vmatpush.msra.mxu0 %v770
        %808 = vmatpush.msra.mxu0 %v769
        %809 = vmatpush.msra.mxu0 %v768
        %810 = vmatpush.msra.mxu0 %v767
        %811 = vmatpush.msra.mxu0 %v766
        %812 = vmatpush.msra.mxu0 %v765
        %813 = vmatmul.f32.gmra.mxu0 %v669
        %v814 = vpop.f32.mrf.mxu0
        %v815 = vadd.f32 0.0, %v814
        %816 = vmatmul.f32.gmra.mxu0 %v671
        %v817 = vpop.f32.mrf.mxu0
        %v818 = vadd.f32 0.0, %v817
        %819 = vmatmul.f32.gmra.mxu0 %v673
        %v820 = vpop.f32.mrf.mxu0
        %v821 = vadd.f32 0.0, %v820
        %822 = vmatmul.f32.gmra.mxu0 %v675
        %v823 = vpop.f32.mrf.mxu0
        %v824 = vadd.f32 0.0, %v823
        %825 = vmatmul.f32.gmra.mxu0 %v677
        %v826 = vpop.f32.mrf.mxu0
        %v827 = vadd.f32 0.0, %v826
        %828 = vmatmul.f32.gmra.mxu0 %v679
        %v829 = vpop.f32.mrf.mxu0
        %v830 = vadd.f32 0.0, %v829
        %831 = vmatmul.f32.gmra.mxu0 %v681
        %v832 = vpop.f32.mrf.mxu0
        %v833 = vadd.f32 0.0, %v832
        %834 = vmatmul.f32.gmra.mxu0 %v683
        %v835 = vpop.f32.mrf.mxu0
        %v836 = vadd.f32 0.0, %v835
        %837 = vmatmul.f32.gmra.mxu0 %v685
        %v838 = vpop.f32.mrf.mxu0
        %v839 = vadd.f32 0.0, %v838
        %840 = vmatmul.f32.gmra.mxu0 %v687
        %v841 = vpop.f32.mrf.mxu0
        %v842 = vadd.f32 0.0, %v841
        %843 = vmatmul.f32.gmra.mxu0 %v689
        %v844 = vpop.f32.mrf.mxu0
        %v845 = vadd.f32 0.0, %v844
        %846 = vmatmul.f32.gmra.mxu0 %v691
        %v847 = vpop.f32.mrf.mxu0
        %v848 = vadd.f32 0.0, %v847
        %849 = vmatmul.f32.gmra.mxu0 %v693
        %v850 = vpop.f32.mrf.mxu0
        %v851 = vadd.f32 0.0, %v850
        %852 = vmatmul.f32.gmra.mxu0 %v695
        %v853 = vpop.f32.mrf.mxu0
        %v854 = vadd.f32 0.0, %v853
        %855 = vmatmul.f32.gmra.mxu0 %v697
        %v856 = vpop.f32.mrf.mxu0
        %v857 = vadd.f32 0.0, %v856
        %858 = vmatmul.f32.gmra.mxu0 %v699
        %v859 = vpop.f32.mrf.mxu0
        %v860 = vadd.f32 0.0, %v859
        %861 = vmatmul.f32.gmra.mxu0 %v701
        %v862 = vpop.f32.mrf.mxu0
        %v863 = vadd.f32 0.0, %v862
        %864 = vmatmul.f32.gmra.mxu0 %v703
        %v865 = vpop.f32.mrf.mxu0
        %v866 = vadd.f32 0.0, %v865
        %867 = vmatmul.f32.gmra.mxu0 %v705
        %v868 = vpop.f32.mrf.mxu0
        %v869 = vadd.f32 0.0, %v868
        %870 = vmatmul.f32.gmra.mxu0 %v707
        %v871 = vpop.f32.mrf.mxu0
        %v872 = vadd.f32 0.0, %v871
        %873 = vmatmul.f32.gmra.mxu0 %v709
        %v874 = vpop.f32.mrf.mxu0
        %v875 = vadd.f32 0.0, %v874
        %876 = vmatmul.f32.gmra.mxu0 %v711
        %v877 = vpop.f32.mrf.mxu0
        %v878 = vadd.f32 0.0, %v877
        %879 = vmatmul.f32.gmra.mxu0 %v713
        %v880 = vpop.f32.mrf.mxu0
        %v881 = vadd.f32 0.0, %v880
        %882 = vmatmul.f32.gmra.mxu0 %v715
        %v883 = vpop.f32.mrf.mxu0
        %v884 = vadd.f32 0.0, %v883
        %885 = vmatmul.f32.gmra.mxu0 %v717
        %v886 = vpop.f32.mrf.mxu0
        %v887 = vadd.f32 0.0, %v886
        %888 = vmatmul.f32.gmra.mxu0 %v719
        %v889 = vpop.f32.mrf.mxu0
        %v890 = vadd.f32 0.0, %v889
        %891 = vmatmul.f32.gmra.mxu0 %v721
        %v892 = vpop.f32.mrf.mxu0
        %v893 = vadd.f32 0.0, %v892
        %894 = vmatmul.f32.gmra.mxu0 %v723
        %v895 = vpop.f32.mrf.mxu0
        %v896 = vadd.f32 0.0, %v895
        %897 = vmatmul.f32.gmra.mxu0 %v725
        %v898 = vpop.f32.mrf.mxu0
        %v899 = vadd.f32 0.0, %v898
        %900 = vmatmul.f32.gmra.mxu0 %v727
        %v901 = vpop.f32.mrf.mxu0
        %v902 = vadd.f32 0.0, %v901
        %903 = vmatmul.f32.gmra.mxu0 %v729
        %v904 = vpop.f32.mrf.mxu0
        %v905 = vadd.f32 0.0, %v904
        %906 = vmatmul.f32.gmra.mxu0 %v731
        %v907 = vpop.f32.mrf.mxu0
        %v908 = vadd.f32 0.0, %v907
        %909 = vdwg.mxu0
        %910 = vmatpush.msra.mxu0 %v796
        %911 = vmatpush.msra.mxu0 %v795
        %912 = vmatpush.msra.mxu0 %v794
        %913 = vmatpush.msra.mxu0 %v793
        %914 = vmatpush.msra.mxu0 %v792
        %915 = vmatpush.msra.mxu0 %v791
        %916 = vmatpush.msra.mxu0 %v790
        %917 = vmatpush.msra.mxu0 %v789
        %918 = vmatpush.msra.mxu0 %v788
        %919 = vmatpush.msra.mxu0 %v787
        %920 = vmatpush.msra.mxu0 %v786
        %921 = vmatpush.msra.mxu0 %v785
        %922 = vmatpush.msra.mxu0 %v784
        %923 = vmatpush.msra.mxu0 %v783
        %924 = vmatpush.msra.mxu0 %v782
        %925 = vmatpush.msra.mxu0 %v781
        %926 = vmatmul.f32.gmra.mxu0 %v670
        %v927 = vpop.f32.mrf.mxu0
        %v928 = vadd.f32 %v815, %v927
        %929 = vmatmul.f32.gmra.mxu0 %v672
        %v930 = vpop.f32.mrf.mxu0
        %v931 = vadd.f32 %v818, %v930
        %932 = vmatmul.f32.gmra.mxu0 %v674
        %v933 = vpop.f32.mrf.mxu0
        %v934 = vadd.f32 %v821, %v933
        %935 = vmatmul.f32.gmra.mxu0 %v676
        %v936 = vpop.f32.mrf.mxu0
        %v937 = vadd.f32 %v824, %v936
        %938 = vmatmul.f32.gmra.mxu0 %v678
        %v939 = vpop.f32.mrf.mxu0
        %v940 = vadd.f32 %v827, %v939
        %941 = vmatmul.f32.gmra.mxu0 %v680
        %v942 = vpop.f32.mrf.mxu0
        %v943 = vadd.f32 %v830, %v942
        %944 = vmatmul.f32.gmra.mxu0 %v682
        %v945 = vpop.f32.mrf.mxu0
        %v946 = vadd.f32 %v833, %v945
        %947 = vmatmul.f32.gmra.mxu0 %v684
        %v948 = vpop.f32.mrf.mxu0
        %v949 = vadd.f32 %v836, %v948
        %950 = vmatmul.f32.gmra.mxu0 %v686
        %v951 = vpop.f32.mrf.mxu0
        %v952 = vadd.f32 %v839, %v951
        %953 = vmatmul.f32.gmra.mxu0 %v688
        %v954 = vpop.f32.mrf.mxu0
        %v955 = vadd.f32 %v842, %v954
        %956 = vmatmul.f32.gmra.mxu0 %v690
        %v957 = vpop.f32.mrf.mxu0
        %v958 = vadd.f32 %v845, %v957
        %959 = vmatmul.f32.gmra.mxu0 %v692
        %v960 = vpop.f32.mrf.mxu0
        %v961 = vadd.f32 %v848, %v960
        %962 = vmatmul.f32.gmra.mxu0 %v694
        %v963 = vpop.f32.mrf.mxu0
        %v964 = vadd.f32 %v851, %v963
        %965 = vmatmul.f32.gmra.mxu0 %v696
        %v966 = vpop.f32.mrf.mxu0
        %v967 = vadd.f32 %v854, %v966
        %968 = vmatmul.f32.gmra.mxu0 %v698
        %v969 = vpop.f32.mrf.mxu0
        %v970 = vadd.f32 %v857, %v969
        %971 = vmatmul.f32.gmra.mxu0 %v700
        %v972 = vpop.f32.mrf.mxu0
        %v973 = vadd.f32 %v860, %v972
        %974 = vmatmul.f32.gmra.mxu0 %v702
        %v975 = vpop.f32.mrf.mxu0
        %v976 = vadd.f32 %v863, %v975
        %977 = vmatmul.f32.gmra.mxu0 %v704
        %v978 = vpop.f32.mrf.mxu0
        %v979 = vadd.f32 %v866, %v978
        %980 = vmatmul.f32.gmra.mxu0 %v706
        %v981 = vpop.f32.mrf.mxu0
        %v982 = vadd.f32 %v869, %v981
        %983 = vmatmul.f32.gmra.mxu0 %v708
        %v984 = vpop.f32.mrf.mxu0
        %v985 = vadd.f32 %v872, %v984
        %986 = vmatmul.f32.gmra.mxu0 %v710
        %v987 = vpop.f32.mrf.mxu0
        %v988 = vadd.f32 %v875, %v987
        %989 = vmatmul.f32.gmra.mxu0 %v712
        %v990 = vpop.f32.mrf.mxu0
        %v991 = vadd.f32 %v878, %v990
        %992 = vmatmul.f32.gmra.mxu0 %v714
        %v993 = vpop.f32.mrf.mxu0
        %v994 = vadd.f32 %v881, %v993
        %995 = vmatmul.f32.gmra.mxu0 %v716
        %v996 = vpop.f32.mrf.mxu0
        %v997 = vadd.f32 %v884, %v996
        %998 = vmatmul.f32.gmra.mxu0 %v718
        %v999 = vpop.f32.mrf.mxu0
        %v1000 = vadd.f32 %v887, %v999
        %1001 = vmatmul.f32.gmra.mxu0 %v720
        %v1002 = vpop.f32.mrf.mxu0
        %v1003 = vadd.f32 %v890, %v1002
        %1004 = vmatmul.f32.gmra.mxu0 %v722
        %v1005 = vpop.f32.mrf.mxu0
        %v1006 = vadd.f32 %v893, %v1005
        %1007 = vmatmul.f32.gmra.mxu0 %v724
        %v1008 = vpop.f32.mrf.mxu0
        %v1009 = vadd.f32 %v896, %v1008
        %1010 = vmatmul.f32.gmra.mxu0 %v726
        %v1011 = vpop.f32.mrf.mxu0
        %v1012 = vadd.f32 %v899, %v1011
        %1013 = vmatmul.f32.gmra.mxu0 %v728
        %v1014 = vpop.f32.mrf.mxu0
        %v1015 = vadd.f32 %v902, %v1014
        %1016 = vmatmul.f32.gmra.mxu0 %v730
        %v1017 = vpop.f32.mrf.mxu0
        %v1018 = vadd.f32 %v905, %v1017
        %1019 = vmatmul.f32.gmra.mxu0 %v732
        %v1020 = vpop.f32.mrf.mxu0
        %v1021 = vadd.f32 %v908, %v1020
        %1022 = vdwg.mxu0
        %v1023 = vadd.f32 %v733, %v928
        %v1024 = vadd.f32 %v734, %v931
        %v1025 = vadd.f32 %v735, %v934
        %v1026 = vadd.f32 %v736, %v937
        %v1027 = vadd.f32 %v737, %v940
        %v1028 = vadd.f32 %v738, %v943
        %v1029 = vadd.f32 %v739, %v946
        %v1030 = vadd.f32 %v740, %v949
        %v1031 = vadd.f32 %v741, %v952
        %v1032 = vadd.f32 %v742, %v955
        %v1033 = vadd.f32 %v743, %v958
        %v1034 = vadd.f32 %v744, %v961
        %v1035 = vadd.f32 %v745, %v964
        %v1036 = vadd.f32 %v746, %v967
        %v1037 = vadd.f32 %v747, %v970
        %v1038 = vadd.f32 %v748, %v973
        %v1039 = vadd.f32 %v749, %v976
        %v1040 = vadd.f32 %v750, %v979
        %v1041 = vadd.f32 %v751, %v982
        %v1042 = vadd.f32 %v752, %v985
        %v1043 = vadd.f32 %v753, %v988
        %v1044 = vadd.f32 %v754, %v991
        %v1045 = vadd.f32 %v755, %v994
        %v1046 = vadd.f32 %v756, %v997
        %v1047 = vadd.f32 %v757, %v1000
        %v1048 = vadd.f32 %v758, %v1003
        %v1049 = vadd.f32 %v759, %v1006
        %v1050 = vadd.f32 %v760, %v1009
        %v1051 = vadd.f32 %v761, %v1012
        %v1052 = vadd.f32 %v762, %v1015
        %v1053 = vadd.f32 %v763, %v1018
        %v1054 = vadd.f32 %v764, %v1021
        %1055 = vst [vmem:[#allocation2] sm:$0xff] %v1023
        %1056 = vst [vmem:[#allocation2 + $0x8] sm:$0xff] %v1024
        %1057 = vst [vmem:[#allocation2 + $0x10] sm:$0xff] %v1025
        %1058 = vst [vmem:[#allocation2 + $0x18] sm:$0xff] %v1026
        %1059 = vst [vmem:[#allocation2 + $0x20] sm:$0xff] %v1027
        %1060 = vst [vmem:[#allocation2 + $0x28] sm:$0xff] %v1028
        %1061 = vst [vmem:[#allocation2 + $0x30] sm:$0xff] %v1029
        %1062 = vst [vmem:[#allocation2 + $0x38] sm:$0xff] %v1030
        %1063 = vst [vmem:[#allocation2 + $0x40] sm:$0xff] %v1031
        %1064 = vst [vmem:[#allocation2 + $0x48] sm:$0xff] %v1032
        %1065 = vst [vmem:[#allocation2 + $0x50] sm:$0xff] %v1033
        %1066 = vst [vmem:[#allocation2 + $0x58] sm:$0xff] %v1034
        %1067 = vst [vmem:[#allocation2 + $0x60] sm:$0xff] %v1035
        %1068 = vst [vmem:[#allocation2 + $0x68] sm:$0xff] %v1036
        %1069 = vst [vmem:[#allocation2 + $0x70] sm:$0xff] %v1037
        %1070 = vst [vmem:[#allocation2 + $0x78] sm:$0xff] %v1038
        %1071 = vst [vmem:[#allocation2 + $0x80] sm:$0xff] %v1039
        %1072 = vst [vmem:[#allocation2 + $0x88] sm:$0xff] %v1040
        %1073 = vst [vmem:[#allocation2 + $0x90] sm:$0xff] %v1041
        %1074 = vst [vmem:[#allocation2 + $0x98] sm:$0xff] %v1042
        %1075 = vst [vmem:[#allocation2 + $0xa0] sm:$0xff] %v1043
        %1076 = vst [vmem:[#allocation2 + $0xa8] sm:$0xff] %v1044
        %1077 = vst [vmem:[#allocation2 + $0xb0] sm:$0xff] %v1045
        %1078 = vst [vmem:[#allocation2 + $0xb8] sm:$0xff] %v1046
        %1079 = vst [vmem:[#allocation2 + $0xc0] sm:$0xff] %v1047
        %1080 = vst [vmem:[#allocation2 + $0xc8] sm:$0xff] %v1048
        %1081 = vst [vmem:[#allocation2 + $0xd0] sm:$0xff] %v1049
        %1082 = vst [vmem:[#allocation2 + $0xd8] sm:$0xff] %v1050
        %1083 = vst [vmem:[#allocation2 + $0xe0] sm:$0xff] %v1051
        %1084 = vst [vmem:[#allocation2 + $0xe8] sm:$0xff] %v1052
        %1085 = vst [vmem:[#allocation2 + $0xf0] sm:$0xff] %v1053
        %1086 = vst [vmem:[#allocation2 + $0xf8] sm:$0xff] %v1054
        %p1087 = scmp.eq.s32.totalorder %s26, 1
        // Predicated region
        $region57: #{feed_forward_block.1} parent=39 // pred_check
          %p1088 = pneg %p1087
        $region58: #{feed_forward_block.1} parent=39 // pred_check_branch
          %1090 = sbr.rel (%p1088) target = $region60
        $region59: #{feed_forward_block.1} parent=39 // pred_region
          %v1091 = vld [vmem:[#allocation2] sm:$0xff]
          %v1092 = vld [vmem:[#allocation2 + $0x8] sm:$0xff]
          %v1093 = vld [vmem:[#allocation2 + $0x10] sm:$0xff]
          %v1094 = vld [vmem:[#allocation2 + $0x18] sm:$0xff]
          %v1095 = vld [vmem:[#allocation2 + $0x20] sm:$0xff]
          %v1096 = vld [vmem:[#allocation2 + $0x28] sm:$0xff]
          %v1097 = vld [vmem:[#allocation2 + $0x30] sm:$0xff]
          %v1098 = vld [vmem:[#allocation2 + $0x38] sm:$0xff]
          %v1099 = vld [vmem:[#allocation2 + $0x40] sm:$0xff]
          %v1100 = vld [vmem:[#allocation2 + $0x48] sm:$0xff]
          %v1101 = vld [vmem:[#allocation2 + $0x50] sm:$0xff]
          %v1102 = vld [vmem:[#allocation2 + $0x58] sm:$0xff]
          %v1103 = vld [vmem:[#allocation2 + $0x60] sm:$0xff]
          %v1104 = vld [vmem:[#allocation2 + $0x68] sm:$0xff]
          %v1105 = vld [vmem:[#allocation2 + $0x70] sm:$0xff]
          %v1106 = vld [vmem:[#allocation2 + $0x78] sm:$0xff]
          %v1107 = vld [vmem:[#allocation2 + $0x80] sm:$0xff]
          %v1108 = vld [vmem:[#allocation2 + $0x88] sm:$0xff]
          %v1109 = vld [vmem:[#allocation2 + $0x90] sm:$0xff]
          %v1110 = vld [vmem:[#allocation2 + $0x98] sm:$0xff]
          %v1111 = vld [vmem:[#allocation2 + $0xa0] sm:$0xff]
          %v1112 = vld [vmem:[#allocation2 + $0xa8] sm:$0xff]
          %v1113 = vld [vmem:[#allocation2 + $0xb0] sm:$0xff]
          %v1114 = vld [vmem:[#allocation2 + $0xb8] sm:$0xff]
          %v1115 = vld [vmem:[#allocation2 + $0xc0] sm:$0xff]
          %v1116 = vld [vmem:[#allocation2 + $0xc8] sm:$0xff]
          %v1117 = vld [vmem:[#allocation2 + $0xd0] sm:$0xff]
          %v1118 = vld [vmem:[#allocation2 + $0xd8] sm:$0xff]
          %v1119 = vld [vmem:[#allocation2 + $0xe0] sm:$0xff]
          %v1120 = vld [vmem:[#allocation2 + $0xe8] sm:$0xff]
          %v1121 = vld [vmem:[#allocation2 + $0xf0] sm:$0xff]
          %v1122 = vld [vmem:[#allocation2 + $0xf8] sm:$0xff]
          %v1123 = vld [vmem:[%s4] sm:$0x1]
          %v1125 = vperm.slane %v1123, 0
          %v1127 = vadd.f32 %v1091, %v1125
          %v1128 = vadd.f32 %v1092, %v1125
          %v1129 = vadd.f32 %v1093, %v1125
          %v1130 = vadd.f32 %v1094, %v1125
          %v1131 = vadd.f32 %v1095, %v1125
          %v1132 = vadd.f32 %v1096, %v1125
          %v1133 = vadd.f32 %v1097, %v1125
          %v1134 = vadd.f32 %v1098, %v1125
          %v1135 = vadd.f32 %v1099, %v1125
          %v1136 = vadd.f32 %v1100, %v1125
          %v1137 = vadd.f32 %v1101, %v1125
          %v1138 = vadd.f32 %v1102, %v1125
          %v1139 = vadd.f32 %v1103, %v1125
          %v1140 = vadd.f32 %v1104, %v1125
          %v1141 = vadd.f32 %v1105, %v1125
          %v1142 = vadd.f32 %v1106, %v1125
          %v1143 = vadd.f32 %v1107, %v1125
          %v1144 = vadd.f32 %v1108, %v1125
          %v1145 = vadd.f32 %v1109, %v1125
          %v1146 = vadd.f32 %v1110, %v1125
          %v1147 = vadd.f32 %v1111, %v1125
          %v1148 = vadd.f32 %v1112, %v1125
          %v1149 = vadd.f32 %v1113, %v1125
          %v1150 = vadd.f32 %v1114, %v1125
          %v1151 = vadd.f32 %v1115, %v1125
          %v1152 = vadd.f32 %v1116, %v1125
          %v1153 = vadd.f32 %v1117, %v1125
          %v1154 = vadd.f32 %v1118, %v1125
          %v1155 = vadd.f32 %v1119, %v1125
          %v1156 = vadd.f32 %v1120, %v1125
          %v1157 = vadd.f32 %v1121, %v1125
          %v1158 = vadd.f32 %v1122, %v1125
          %1159 = vst [vmem:[#allocation9] sm:$0xff] %v1127
          %1160 = vst [vmem:[#allocation9 + $0x8] sm:$0xff] %v1128
          %1161 = vst [vmem:[#allocation9 + $0x10] sm:$0xff] %v1129
          %1162 = vst [vmem:[#allocation9 + $0x18] sm:$0xff] %v1130
          %1163 = vst [vmem:[#allocation9 + $0x20] sm:$0xff] %v1131
          %1164 = vst [vmem:[#allocation9 + $0x28] sm:$0xff] %v1132
          %1165 = vst [vmem:[#allocation9 + $0x30] sm:$0xff] %v1133
          %1166 = vst [vmem:[#allocation9 + $0x38] sm:$0xff] %v1134
          %1167 = vst [vmem:[#allocation9 + $0x40] sm:$0xff] %v1135
          %1168 = vst [vmem:[#allocation9 + $0x48] sm:$0xff] %v1136
          %1169 = vst [vmem:[#allocation9 + $0x50] sm:$0xff] %v1137
          %1170 = vst [vmem:[#allocation9 + $0x58] sm:$0xff] %v1138
          %1171 = vst [vmem:[#allocation9 + $0x60] sm:$0xff] %v1139
          %1172 = vst [vmem:[#allocation9 + $0x68] sm:$0xff] %v1140
          %1173 = vst [vmem:[#allocation9 + $0x70] sm:$0xff] %v1141
          %1174 = vst [vmem:[#allocation9 + $0x78] sm:$0xff] %v1142
          %1175 = vst [vmem:[#allocation9 + $0x80] sm:$0xff] %v1143
          %1176 = vst [vmem:[#allocation9 + $0x88] sm:$0xff] %v1144
          %1177 = vst [vmem:[#allocation9 + $0x90] sm:$0xff] %v1145
          %1178 = vst [vmem:[#allocation9 + $0x98] sm:$0xff] %v1146
          %1179 = vst [vmem:[#allocation9 + $0xa0] sm:$0xff] %v1147
          %1180 = vst [vmem:[#allocation9 + $0xa8] sm:$0xff] %v1148
          %1181 = vst [vmem:[#allocation9 + $0xb0] sm:$0xff] %v1149
          %1182 = vst [vmem:[#allocation9 + $0xb8] sm:$0xff] %v1150
          %1183 = vst [vmem:[#allocation9 + $0xc0] sm:$0xff] %v1151
          %1184 = vst [vmem:[#allocation9 + $0xc8] sm:$0xff] %v1152
          %1185 = vst [vmem:[#allocation9 + $0xd0] sm:$0xff] %v1153
          %1186 = vst [vmem:[#allocation9 + $0xd8] sm:$0xff] %v1154
          %1187 = vst [vmem:[#allocation9 + $0xe0] sm:$0xff] %v1155
          %1188 = vst [vmem:[#allocation9 + $0xe8] sm:$0xff] %v1156
          %1189 = vst [vmem:[#allocation9 + $0xf0] sm:$0xff] %v1157
          %1190 = vst [vmem:[#allocation9 + $0xf8] sm:$0xff] %v1158
        $region60: #{feed_forward_block.1} parent=39 // pred_fallthru
          _
        // Predicated region
        $region61: #{feed_forward_block.1} parent=39 // pred_check
          %p1191 = pneg %p176
        $region62: #{feed_forward_block.1} parent=39 // pred_check_branch
          %1193 = sbr.rel (%p1191) target = $region64
        $region63: #{feed_forward_block.1} parent=39 // pred_region
          %s1194 = smul.u32 32, %s25
          %1196 = vsyncadd [#allocation5], 0
          %s1197 = smul.addr %s1194, 8
          %s1198 = scalar_lea.hbm %s5, %s1197
          %s1199 = sshll.u32 [#allocation9], 4
          %s1200 = int_to_ptr.vmem [resolvable:$true] %s1199
          %s1201 = sshll.u32 %s1198, 4
          %s1202 = int_to_ptr.hbm [resolvable:$true] %s1201
          %1207 = dma.vmem_to_hbm [thread:$0]  %s1200, 4096, %s1202, [#allocation5], 128, 128, 8
        $region64: #{feed_forward_block.1} parent=39 // pred_fallthru
          _
        // Predicated region
        $region65: #{feed_forward_block.1} parent=39 // pred_check
          %p1208 = pneg %p176
        $region66: #{feed_forward_block.1} parent=39 // pred_check_branch
          %1210 = sbr.rel (%p1208) target = $region68
        $region67: #{feed_forward_block.1} parent=39 // pred_region
          %1212 = dma.done [#allocation5], 4096
        $region68: #{feed_forward_block.1} parent=39 // pred_fallthru
          _
      $region40: #{feed_forward_block.1} parent=5 // pred_fallthru
        _
      %p1213 = scmp.le.s32.totalorder 2, %s16
      // Predicated region
      $region69: #{feed_forward_block.1} parent=5 // pred_check
        %p1214 = pneg %p1213
      $region70: #{feed_forward_block.1} parent=5 // pred_check_branch
        %1216 = sbr.rel (%p1214) target = $region72
      $region71: #{feed_forward_block.1} parent=5 // pred_region
        %s1217 = ssub.s32 %s16, 2
      $region72: #{feed_forward_block.1} parent=5 // pred_fallthru
        _
    $region6: #{feed_forward_block.1} parent=1 // loop_footer
      %s20 = sadd.s32 1, %s16
    $region7: #{feed_forward_block.1} parent=1 // loop_footer_branch
      %15 = sbr.rel target = $region3
    $region8: #{feed_forward_block.1} parent=1 // loop_exit
      _
    %1218 = vsyncpa [#allocation4], 1
    %s1219 = scalar_lea.sflag [#allocation4], 1
    %1220 = vsyncpa %s1219, 1
    %1221 = vsyncpa [#allocation7], 1
    %s1222 = scalar_lea.sflag [#allocation7], 1
    %1223 = vsyncpa %s1222, 1
    %1224 = vsyncpa [#allocation5], 1
    %s1225 = scalar_lea.sflag [#allocation5], 1
    %1226 = vsyncpa %s1225, 1

</llo_original>
